<compile_context>
chip_gen: v7x
topology: tpu7x:2x2x1
jax: 0.10.0
libtpu: 0.0.40
codegen_flags: <defaults>
</compile_context>

<pallas_src>
import jax
import jax.numpy as jnp
from jax.experimental import pallas as pl
from jax.experimental.pallas import tpu as pltpu


def _round_up(x, m):
    return ((x + m - 1) // m) * m


def _tile_defaults():
    """(tm, vmem_limit_bytes) heuristic per TPU generation."""
    try:
        kind = jax.devices()[0].device_kind.lower()
    except Exception:
        kind = ""
    if "v5 lite" in kind or "v5e" in kind or "v5litepod" in kind:
        # ~0.82 TB/s: per-step overhead already <7% at tm=4096; don't chase tiles.
        return 4096, 48 << 20
    if "v6" in kind:
        # 128 MiB physical VMEM, ~1.4 TB/s: bigger tiles are free.
        return 8192, 80 << 20
    # v7x (or unknown): 64 MiB/TC physical VMEM -> stay comfortably under it.
    return 8192, 48 << 20


def _channel_attention_kernel(x_ref, w1_ref, b1_ref, w2_ref, b2_ref, o_ref):
    # x_ref: (tm, C*F) lane-dense tile of the flattened input (input dtype).
    x = x_ref[...]

    # fc1 (freq-mean folded into w1_eff) -> relu.  Default MXU precision;
    # accumulation in f32 via preferred_element_type.
    h = jnp.dot(x, w1_ref[...], preferred_element_type=jnp.float32) + b1_ref[...]
    h = jnp.maximum(h, 0.0)                                  # (tm, H) f32

    # fc2 (channel -> (channel,freq) broadcast folded into w2_eff/b2_eff) -> sigmoid.
    a = jnp.dot(h, w2_ref[...], preferred_element_type=jnp.float32) + b2_ref[...]
    attn = jax.nn.sigmoid(a)                                 # (tm, C*F) f32

    # Elementwise multiply in the input dtype; unmasked lane-dense stores.
    o_ref[...] = x * attn.astype(o_ref.dtype)


def channel_attention(x, w1, b1, w2, b2, *, tm=None, vmem_limit_bytes=None):
    """x: (T, N, bands, C, F).  w1: (C, H), b1: (H,), w2: (H, C), b2: (C,)."""
    T, N, bands, C, F = x.shape
    H = w1.shape[1]
    M = T * N * bands
    CF = C * F

    tm_default, vmem_default = _tile_defaults()
    if tm is None:
        tm = tm_default
    if vmem_limit_bytes is None:
        vmem_limit_bytes = vmem_default

    # Fold the freq-mean into fc1 and the per-channel broadcast into fc2.
    # Pure replication/scaling -> exact.  Weights kept in x's dtype so the
    # matmul does not force an f32 up-cast of the whole x tile.
    w_dtype = x.dtype if x.dtype in (jnp.bfloat16, jnp.float32) else jnp.float32
    w1_eff = (jnp.repeat(w1.astype(jnp.float32), F, axis=0) / float(F)).astype(w_dtype)  # (C*F, H)
    w2_eff = jnp.repeat(w2.astype(jnp.float32), F, axis=1).astype(jnp.float32)           # (H, C*F)
    b1_r = b1.astype(jnp.float32).reshape(1, H)                                          # (1, H)
    b2_eff = jnp.repeat(b2.astype(jnp.float32), F).reshape(1, CF)                        # (1, C*F)

    # Lane-dense flatten: (M, C*F).  Contiguous, so the reshape is free.
    x_flat = x.reshape(M, CF)

    # Row tile: large (amortize ~0.35us/step pipeline overhead), sublane-aligned,
    # and capped so mid-sized problems still produce >= 2 grid steps (v7x has
    # 2 TensorCores fed via the "parallel" grid axis).
    if M >= 2048:
        tm_eff = min(tm, _round_up(pl.cdiv(M, 2), 8))
    else:
        tm_eff = min(tm, _round_up(M, 8))
    tm_eff = max(tm_eff, 8)

    # Ragged grid: no jnp.pad of x / no post-slice of the output.  The last
    # block's OOB rows are read as garbage (safe: MLP is strictly row-wise)
    # and OOB writes are masked by Pallas.
    grid = pl.cdiv(M, tm_eff)

    out = pl.pallas_call(
        _channel_attention_kernel,
        out_shape=jax.ShapeDtypeStruct((M, CF), x.dtype),
        grid_spec=pltpu.PrefetchScalarGridSpec(
            num_scalar_prefetch=0,
            grid=(grid,),
            in_specs=[
                pl.BlockSpec((tm_eff, CF), lambda i: (i, 0)),
                pl.BlockSpec((CF, H), lambda i: (0, 0)),
                pl.BlockSpec((1, H), lambda i: (0, 0)),
                pl.BlockSpec((H, CF), lambda i: (0, 0)),
                pl.BlockSpec((1, CF), lambda i: (0, 0)),
            ],
            out_specs=pl.BlockSpec((tm_eff, CF), lambda i: (i, 0)),
        ),
        compiler_params=pltpu.CompilerParams(
            dimension_semantics=("parallel",),
            # Budget ~ double-buffered I/O (4 * tm*CF*dtype) + ~3x block of f32
            # intermediates (lane-padded h, pre-sigmoid, attn).
            vmem_limit_bytes=vmem_limit_bytes,
        ),
    )(x_flat, w1_eff, b1_r, w2_eff, b2_eff)

    return out.reshape(T, N, bands, C, F)


def channel_attention_ref(x, w1, b1, w2, b2):
    m = x.mean(axis=4)
    h = jnp.maximum(
        jnp.dot(m, w1, precision=jax.lax.Precision.HIGHEST) + b1, 0.0)
    attn = jax.nn.sigmoid(
        jnp.dot(h, w2, precision=jax.lax.Precision.HIGHEST) + b2)
    return x * attn[..., None]


if __name__ == "__main__":
    # Small shapes consistent with the module's forward.
    T, N, bands, C, F = 4, 2, 2, 16, 8
    reduction_ratio = 4
    Hd = C // reduction_ratio

    key = jax.random.PRNGKey(0)
    kx, k1, k2, k3, k4 = jax.random.split(key, 5)

    x = jax.random.normal(kx, (T, N, bands, C, F), dtype=jnp.float32)

    # Deterministic synthetic Linear params (PyTorch-style uniform bounds).
    bound1 = 1.0 / (C ** 0.5)
    w1 = jax.random.uniform(k1, (C, Hd), minval=-bound1, maxval=bound1,
                            dtype=jnp.float32)
    b1 = jax.random.uniform(k2, (Hd,), minval=-bound1, maxval=bound1,
                            dtype=jnp.float32)
    bound2 = 1.0 / (Hd ** 0.5)
    w2 = jax.random.uniform(k3, (Hd, C), minval=-bound2, maxval=bound2,
                            dtype=jnp.float32)
    b2 = jax.random.uniform(k4, (C,), minval=-bound2, maxval=bound2,
                            dtype=jnp.float32)

    out = channel_attention(x, w1, b1, w2, b2)
    out = jax.block_until_ready(out)
    ref = channel_attention_ref(x, w1, b1, w2, b2)
    assert out.shape == x.shape
    # Tolerance loosened vs 1e-5: kernel matmuls use default (bf16) MXU
    # precision per the performance review; activations are O(1).
    assert jnp.allclose(out, ref, atol=1e-2, rtol=1e-2), float(
        jnp.max(jnp.abs(out - ref)))

    # Exercise the ragged (M % tm != 0), multi-block path with a small tile.
    T2, N2 = 25, 3  # M = 25*3*2 = 150 rows; tm=64 -> grid=3, last block = 22 rows.
    x2 = jax.random.normal(jax.random.PRNGKey(1), (T2, N2, bands, C, F),
                           dtype=jnp.float32)
    out2 = jax.block_until_ready(channel_attention(x2, w1, b1, w2, b2, tm=64))
    ref2 = channel_attention_ref(x2, w1, b1, w2, b2)
    assert out2.shape == x2.shape
    assert jnp.allclose(out2, ref2, atol=1e-2, rtol=1e-2), float(
        jnp.max(jnp.abs(out2 - ref2)))

    print("KERNEL_OK")
</pallas_src>

<mosaic_0001>
module attributes {stable_mosaic.version = 11 : i64} {
  func.func @_channel_attention_kernel(%arg0: i32, %arg1: memref<16x128xf32, #tpu.memory_space<vmem>>, %arg2: memref<128x4xf32, #tpu.memory_space<vmem>>, %arg3: memref<1x4xf32, #tpu.memory_space<vmem>>, %arg4: memref<4x128xf32, #tpu.memory_space<vmem>>, %arg5: memref<1x128xf32, #tpu.memory_space<vmem>>, %arg6: memref<16x128xf32, #tpu.memory_space<vmem>>) attributes {dimension_semantics = [#tpu.dimension_semantics<parallel>], iteration_bounds = array<i64: 1>, scalar_prefetch = 0 : i64, scratch_operands = 0 : i64, tpu.core_type = #tpu.core_type<tc>, window_params = [{transform_indices = @transform_0, window_bounds = array<i64: 16, 128>}, {pipeline_mode = #tpu.pipeline_mode<synchronous>, transform_indices = @transform_1, window_bounds = array<i64: 128, 4>}, {pipeline_mode = #tpu.pipeline_mode<synchronous>, transform_indices = @transform_2, window_bounds = array<i64: 1, 4>}, {pipeline_mode = #tpu.pipeline_mode<synchronous>, transform_indices = @transform_3, window_bounds = array<i64: 4, 128>}, {pipeline_mode = #tpu.pipeline_mode<synchronous>, transform_indices = @transform_4, window_bounds = array<i64: 1, 128>}, {transform_indices = @transform_5, window_bounds = array<i64: 16, 128>}]} {
    %c0 = arith.constant 0 : index
    %c0_0 = arith.constant 0 : index
    %0 = vector.load %arg1[%c0, %c0_0] : memref<16x128xf32, #tpu.memory_space<vmem>>, vector<16x128xf32>
    %c0_1 = arith.constant 0 : index
    %c0_2 = arith.constant 0 : index
    %1 = vector.load %arg2[%c0_1, %c0_2] : memref<128x4xf32, #tpu.memory_space<vmem>>, vector<128x4xf32>
    %cst = arith.constant dense<0.000000e+00> : vector<16x4xf32>
    %2 = tpu.matmul %0, %1, %cst {dimension_numbers = #tpu.dot_dimension_numbers<[1], [0], [0], [1], [0, 0, 1, 1], [], []>} : vector<16x128xf32>, vector<128x4xf32>, vector<16x4xf32> -> vector<16x4xf32>
    %c0_3 = arith.constant 0 : index
    %c0_4 = arith.constant 0 : index
    %3 = vector.load %arg3[%c0_3, %c0_4] : memref<1x4xf32, #tpu.memory_space<vmem>>, vector<1x4xf32>
    %4 = vector.broadcast %3 : vector<1x4xf32> to vector<16x4xf32>
    %5 = arith.addf %2, %4 : vector<16x4xf32>
    %cst_5 = arith.constant 0.000000e+00 : f32
    %6 = vector.broadcast %cst_5 : f32 to vector<16x4xf32>
    %7 = arith.maximumf %5, %6 : vector<16x4xf32>
    %c0_6 = arith.constant 0 : index
    %c0_7 = arith.constant 0 : index
    %8 = vector.load %arg4[%c0_6, %c0_7] : memref<4x128xf32, #tpu.memory_space<vmem>>, vector<4x128xf32>
    %cst_8 = arith.constant dense<0.000000e+00> : vector<16x128xf32>
    %9 = tpu.matmul %7, %8, %cst_8 {dimension_numbers = #tpu.dot_dimension_numbers<[1], [0], [0], [1], [0, 0, 1, 1], [], []>} : vector<16x4xf32>, vector<4x128xf32>, vector<16x128xf32> -> vector<16x128xf32>
    %c0_9 = arith.constant 0 : index
    %c0_10 = arith.constant 0 : index
    %10 = vector.load %arg5[%c0_9, %c0_10] : memref<1x128xf32, #tpu.memory_space<vmem>>, vector<1x128xf32>
    %11 = vector.broadcast %10 : vector<1x128xf32> to vector<16x128xf32>
    %12 = arith.addf %9, %11 : vector<16x128xf32>
    %13 = arith.negf %12 : vector<16x128xf32>
    %14 = math.exp %13 : vector<16x128xf32>
    %cst_11 = arith.constant 1.000000e+00 : f32
    %15 = vector.broadcast %cst_11 : f32 to vector<16x128xf32>
    %16 = arith.addf %15, %14 : vector<16x128xf32>
    %17 = arith.divf %15, %16 : vector<16x128xf32>
    %18 = arith.mulf %0, %17 : vector<16x128xf32>
    %c0_12 = arith.constant 0 : index
    %c0_13 = arith.constant 0 : index
    %19 = vector.load %arg6[%c0_12, %c0_13] : memref<16x128xf32, #tpu.memory_space<vmem>>, vector<16x128xf32>
    tpu.vector_store %arg6[%c0_12, %c0_13], %18 {strides = array<i32>} : memref<16x128xf32, #tpu.memory_space<vmem>>, vector<16x128xf32>,
    return
  }
  func.func @transform_0(%arg0: i32) -> (i32, i32) {
    %c0_i32 = arith.constant 0 : i32
    %c0_i32_0 = arith.constant 0 : i32
    return %arg0, %c0_i32 : i32, i32
  }
  func.func @transform_1(%arg0: i32) -> (i32, i32) {
    %c0_i32 = arith.constant 0 : i32
    %c0_i32_0 = arith.constant 0 : i32
    %c0_i32_1 = arith.constant 0 : i32
    return %c0_i32, %c0_i32_0 : i32, i32
  }
  func.func @transform_2(%arg0: i32) -> (i32, i32) {
    %c0_i32 = arith.constant 0 : i32
    %c0_i32_0 = arith.constant 0 : i32
    %c0_i32_1 = arith.constant 0 : i32
    return %c0_i32, %c0_i32_0 : i32, i32
  }
  func.func @transform_3(%arg0: i32) -> (i32, i32) {
    %c0_i32 = arith.constant 0 : i32
    %c0_i32_0 = arith.constant 0 : i32
    %c0_i32_1 = arith.constant 0 : i32
    return %c0_i32, %c0_i32_0 : i32, i32
  }
  func.func @transform_4(%arg0: i32) -> (i32, i32) {
    %c0_i32 = arith.constant 0 : i32
    %c0_i32_0 = arith.constant 0 : i32
    %c0_i32_1 = arith.constant 0 : i32
    return %c0_i32, %c0_i32_0 : i32, i32
  }
  func.func @transform_5(%arg0: i32) -> (i32, i32) {
    %c0_i32 = arith.constant 0 : i32
    %c0_i32_0 = arith.constant 0 : i32
    return %arg0, %c0_i32 : i32, i32
  }
}

</mosaic_0001>

<llo_original>
// kernel: tpu_custom_call.1
$region0: #{tpu_custom_call.1}
  #allocation0 [shape = 'u32[]', space=smem, size = 0x4, offset = 0x4, fixed_abs, tag = 'smem constant byte address 0x4 - core index']
  #allocation1 [shape = 'u32[144,128]{1,0:T(1,128)}', space=vmem, size = 0x12000, scoped, tag = 'internal scratch']
  %s0 = inlined_call_operand.vmem [shape: f32[16,128], index: 0, kind: input, shape index: {}]
  %s1 = inlined_call_operand.vmem [shape: f32[128,4], index: 1, kind: input, shape index: {}]
  %s2 = inlined_call_operand.vmem [shape: f32[1,4], index: 2, kind: input, shape index: {}]
  %s3 = inlined_call_operand.vmem [shape: f32[4,128], index: 3, kind: input, shape index: {}]
  %s4 = inlined_call_operand.vmem [shape: f32[1,128], index: 4, kind: input, shape index: {}]
  %s5 = inlined_call_operand.hbm [shape: f32[16,128], index: 5, kind: output, shape index: {}]
  %s6 = sld [smem:[#allocation0]]
  $region30: #{tpu_custom_call.1} parent=0
    _
  %s8 = ssub.s32 1, %s6
  %s9 = scalar_select 0, %s8, %s6
  $region1: #{tpu_custom_call.1} parent=0
    #allocation2 [shape = 'u8[8192]{0}', space=vmem, size = 0x2000, scoped, tag = 'output window, operand 0, single buffered']
    #allocation3 [shape = 's32[1]{0}', space=sflag, size = 0x4, scoped, tag = 'scoped memory for tpu_custom_call.1']
    %10 = vsyncpa [#allocation3], 0
    // Predicated region
    $region2: #{tpu_custom_call.1} parent=1 // pred_check
      _
    $region3: #{tpu_custom_call.1} parent=1 // pred_check_branch
      %12 = sbr.rel (0) target = $region5
    $region4: #{tpu_custom_call.1} parent=1 // pred_region
      _
    $region5: #{tpu_custom_call.1} parent=1 // pred_fallthru
      _
    // Predicated region
    $region6: #{tpu_custom_call.1} parent=1 // pred_check
      _
    $region7: #{tpu_custom_call.1} parent=1 // pred_check_branch
      %14 = sbr.rel (0) target = $region9
    $region8: #{tpu_custom_call.1} parent=1 // pred_region
      _
    $region9: #{tpu_custom_call.1} parent=1 // pred_fallthru
      _
    // Predicated region
    $region10: #{tpu_custom_call.1} parent=1 // pred_check
      _
    $region11: #{tpu_custom_call.1} parent=1 // pred_check_branch
      %16 = sbr.rel (0) target = $region13
    $region12: #{tpu_custom_call.1} parent=1 // pred_region
      _
    $region13: #{tpu_custom_call.1} parent=1 // pred_fallthru
      _
    // Predicated region
    $region14: #{tpu_custom_call.1} parent=1 // pred_check
      _
    $region15: #{tpu_custom_call.1} parent=1 // pred_check_branch
      %18 = sbr.rel (0) target = $region17
    $region16: #{tpu_custom_call.1} parent=1 // pred_region
      _
    $region17: #{tpu_custom_call.1} parent=1 // pred_fallthru
      _
    // Predicated region
    $region18: #{tpu_custom_call.1} parent=1 // pred_check
      _
    $region19: #{tpu_custom_call.1} parent=1 // pred_check_branch
      %20 = sbr.rel (0) target = $region21
    $region20: #{tpu_custom_call.1} parent=1 // pred_region
      _
    $region21: #{tpu_custom_call.1} parent=1 // pred_fallthru
      _
    %v21 = vld [vmem:[%s0] sm:$0xff]
    %v22 = vld [vmem:[%s0 + $0x8] sm:$0xff]
    %v23 = vld [vmem:[%s1] sm:$0xff]
    %v24 = vld [vmem:[%s1 + $0x8] sm:$0xff]
    %v25 = vld [vmem:[%s1 + $0x10] sm:$0xff]
    %v26 = vld [vmem:[%s1 + $0x18] sm:$0xff]
    %v27 = vld [vmem:[%s1 + $0x20] sm:$0xff]
    %v28 = vld [vmem:[%s1 + $0x28] sm:$0xff]
    %v29 = vld [vmem:[%s1 + $0x30] sm:$0xff]
    %v30 = vld [vmem:[%s1 + $0x38] sm:$0xff]
    %v31 = vld [vmem:[%s1 + $0x40] sm:$0xff]
    %v32 = vld [vmem:[%s1 + $0x48] sm:$0xff]
    %v33 = vld [vmem:[%s1 + $0x50] sm:$0xff]
    %v34 = vld [vmem:[%s1 + $0x58] sm:$0xff]
    %v35 = vld [vmem:[%s1 + $0x60] sm:$0xff]
    %v36 = vld [vmem:[%s1 + $0x68] sm:$0xff]
    %v37 = vld [vmem:[%s1 + $0x70] sm:$0xff]
    %v38 = vld [vmem:[%s1 + $0x78] sm:$0xff]
    %v39 = vld [vmem:[%s2] sm:$0x1]
    %v41 = vlaneseq
    %v42 = vshrl.u32 %v41, 7
    %v43 = vsub.s32 0, %v42
    %v44 = vrot.slane %v39, %v43
    %46 = vmatprep.subr.mxu0 0.0
    %47 = vmatpush1.msra.mxu0 %v23
    %48 = vmatprep.subr.mxu0 0.0
    %49 = vmatpush1.msra.mxu0 %v24
    %50 = vmatprep.subr.mxu0 0.0
    %51 = vmatpush1.msra.mxu0 %v25
    %52 = vmatprep.subr.mxu0 0.0
    %53 = vmatpush1.msra.mxu0 %v26
    %54 = vmatprep.subr.mxu0 0.0
    %55 = vmatpush1.msra.mxu0 %v27
    %56 = vmatprep.subr.mxu0 0.0
    %57 = vmatpush1.msra.mxu0 %v28
    %58 = vmatprep.subr.mxu0 0.0
    %59 = vmatpush1.msra.mxu0 %v29
    %60 = vmatprep.subr.mxu0 0.0
    %61 = vmatpush1.msra.mxu0 %v30
    %62 = vmatprep.subr.mxu0 0.0
    %63 = vmatpush1.msra.mxu0 %v31
    %64 = vmatprep.subr.mxu0 0.0
    %65 = vmatpush1.msra.mxu0 %v32
    %66 = vmatprep.subr.mxu0 0.0
    %67 = vmatpush1.msra.mxu0 %v33
    %68 = vmatprep.subr.mxu0 0.0
    %69 = vmatpush1.msra.mxu0 %v34
    %70 = vmatprep.subr.mxu0 0.0
    %71 = vmatpush1.msra.mxu0 %v35
    %72 = vmatprep.subr.mxu0 0.0
    %73 = vmatpush1.msra.mxu0 %v36
    %74 = vmatprep.subr.mxu0 0.0
    %75 = vmatpush1.msra.mxu0 %v37
    %76 = vmatprep.subr.mxu0 0.0
    %77 = vmatpush1.msra.mxu0 %v38
    %78 = vmatprep.subr.mxu0 0.0
    %79 = vmatpush1.msra.mxu0 0.0
    %80 = vmatprep.subr.mxu0 0.0
    %81 = vmatpush1.msra.mxu0 0.0
    %82 = vmatprep.subr.mxu0 0.0
    %83 = vmatpush1.msra.mxu0 0.0
    %84 = vmatprep.subr.mxu0 0.0
    %85 = vmatpush1.msra.mxu0 0.0
    %86 = vmatprep.subr.mxu0 0.0
    %87 = vmatpush1.msra.mxu0 0.0
    %88 = vmatprep.subr.mxu0 0.0
    %89 = vmatpush1.msra.mxu0 0.0
    %90 = vmatprep.subr.mxu0 0.0
    %91 = vmatpush1.msra.mxu0 0.0
    %92 = vmatprep.subr.mxu0 0.0
    %93 = vmatpush1.msra.mxu0 0.0
    %94 = vmatprep.subr.mxu0 0.0
    %95 = vmatpush1.msra.mxu0 0.0
    %96 = vmatprep.subr.mxu0 0.0
    %97 = vmatpush1.msra.mxu0 0.0
    %98 = vmatprep.subr.mxu0 0.0
    %99 = vmatpush1.msra.mxu0 0.0
    %100 = vmatprep.subr.mxu0 0.0
    %101 = vmatpush1.msra.mxu0 0.0
    %102 = vmatprep.subr.mxu0 0.0
    %103 = vmatpush1.msra.mxu0 0.0
    %104 = vmatprep.subr.mxu0 0.0
    %105 = vmatpush1.msra.mxu0 0.0
    %106 = vmatprep.subr.mxu0 0.0
    %107 = vmatpush1.msra.mxu0 0.0
    %108 = vmatprep.subr.mxu0 0.0
    %109 = vmatpush1.msra.mxu0 0.0
    %110 = vmatprep.mubr.f32.mxu0 0.0
    %111 = vmatmul.mubr.f32.gmra.mrb[0].mxu0 %v21
    %v112 = vpop.f32.mrb[0].mxu0
    %v113 = vadd.f32 %v44, %v112
    %v114 = vpop.f32.mrb[0].mxu0
    %115 = vmatprep.mubr.f32.mxu0 0.0
    %116 = vmatmul.mubr.f32.gmra.mrb[0].mxu0 %v22
    %v117 = vpop.f32.mrb[0].mxu0
    %v118 = vadd.f32 %v44, %v117
    %v119 = vpop.f32.mrb[0].mxu0
    %120 = vdwg.mxu0
    %v121 = vmax.f32 %v113, 0.0
    %v122 = vmax.f32 %v118, 0.0
    %v123 = vld [vmem:[%s3] sm:$0xf]
    %v124 = vld [vmem:[%s4] sm:$0x1]
    %v126 = vlaneseq
    %v127 = vshrl.u32 %v126, 7
    %v128 = vsub.s32 0, %v127
    %v129 = vrot.slane %v124, %v128
    %vm131 = vcmask 31744
    %v133 = vsel %vm131, %v121, 0
    %v136 = vsel %vm131, %v122, 0
    %vm138 = vcmask 1043456
    %v140 = vsel %vm138, %v123, 0
    %142 = vmatprep.subr.mxu0 0.0
    %143 = vmatpush1.msra.mxu0 %v140
    %144 = vmatprep.subr.mxu0 0.0
    %145 = vmatpush1.msra.mxu0 0.0
    %146 = vmatprep.subr.mxu0 0.0
    %147 = vmatpush1.msra.mxu0 0.0
    %148 = vmatprep.subr.mxu0 0.0
    %149 = vmatpush1.msra.mxu0 0.0
    %150 = vmatprep.subr.mxu0 0.0
    %151 = vmatpush1.msra.mxu0 0.0
    %152 = vmatprep.subr.mxu0 0.0
    %153 = vmatpush1.msra.mxu0 0.0
    %154 = vmatprep.subr.mxu0 0.0
    %155 = vmatpush1.msra.mxu0 0.0
    %156 = vmatprep.subr.mxu0 0.0
    %157 = vmatpush1.msra.mxu0 0.0
    %158 = vmatprep.subr.mxu0 0.0
    %159 = vmatpush1.msra.mxu0 0.0
    %160 = vmatprep.subr.mxu0 0.0
    %161 = vmatpush1.msra.mxu0 0.0
    %162 = vmatprep.subr.mxu0 0.0
    %163 = vmatpush1.msra.mxu0 0.0
    %164 = vmatprep.subr.mxu0 0.0
    %165 = vmatpush1.msra.mxu0 0.0
    %166 = vmatprep.subr.mxu0 0.0
    %167 = vmatpush1.msra.mxu0 0.0
    %168 = vmatprep.subr.mxu0 0.0
    %169 = vmatpush1.msra.mxu0 0.0
    %170 = vmatprep.subr.mxu0 0.0
    %171 = vmatpush1.msra.mxu0 0.0
    %172 = vmatprep.subr.mxu0 0.0
    %173 = vmatpush1.msra.mxu0 0.0
    %174 = vmatprep.subr.mxu0 0.0
    %175 = vmatpush1.msra.mxu0 0.0
    %176 = vmatprep.subr.mxu0 0.0
    %177 = vmatpush1.msra.mxu0 0.0
    %178 = vmatprep.subr.mxu0 0.0
    %179 = vmatpush1.msra.mxu0 0.0
    %180 = vmatprep.subr.mxu0 0.0
    %181 = vmatpush1.msra.mxu0 0.0
    %182 = vmatprep.subr.mxu0 0.0
    %183 = vmatpush1.msra.mxu0 0.0
    %184 = vmatprep.subr.mxu0 0.0
    %185 = vmatpush1.msra.mxu0 0.0
    %186 = vmatprep.subr.mxu0 0.0
    %187 = vmatpush1.msra.mxu0 0.0
    %188 = vmatprep.subr.mxu0 0.0
    %189 = vmatpush1.msra.mxu0 0.0
    %190 = vmatprep.subr.mxu0 0.0
    %191 = vmatpush1.msra.mxu0 0.0
    %192 = vmatprep.subr.mxu0 0.0
    %193 = vmatpush1.msra.mxu0 0.0
    %194 = vmatprep.subr.mxu0 0.0
    %195 = vmatpush1.msra.mxu0 0.0
    %196 = vmatprep.subr.mxu0 0.0
    %197 = vmatpush1.msra.mxu0 0.0
    %198 = vmatprep.subr.mxu0 0.0
    %199 = vmatpush1.msra.mxu0 0.0
    %200 = vmatprep.subr.mxu0 0.0
    %201 = vmatpush1.msra.mxu0 0.0
    %202 = vmatprep.subr.mxu0 0.0
    %203 = vmatpush1.msra.mxu0 0.0
    %204 = vmatprep.subr.mxu0 0.0
    %205 = vmatpush1.msra.mxu0 0.0
    %206 = vmatprep.mubr.f32.mxu0 0.0
    %207 = vmatmul.mubr.f32.gmra.mrb[0].mxu0 %v133
    %v208 = vpop.f32.mrb[0].mxu0
    %v209 = vadd.f32 %v129, %v208
    %v210 = vpop.f32.mrb[0].mxu0
    %211 = vmatprep.mubr.f32.mxu0 0.0
    %212 = vmatmul.mubr.f32.gmra.mrb[0].mxu0 %v136
    %v213 = vpop.f32.mrb[0].mxu0
    %v214 = vadd.f32 %v129, %v213
    %v215 = vpop.f32.mrb[0].mxu0
    %216 = vdwg.mxu0
    %v217 = vxor.u32 %v209, 2147483648
    %v218 = vxor.u32 %v214, 2147483648
    %v219 = vmul.f32 %v217, 1.442695
    %v220 = vpow.pop %v219
    %v221 = vmul.f32 %v218, 1.442695
    %v222 = vpow.pop %v221
    %v223 = vadd.f32 %v220, 1.0
    %v224 = vadd.f32 %v222, 1.0
    %v225 = vrcp.pop %v223
    %v226 = vmul.f32 1.0, %v225
    %v227 = vrcp.pop %v224
    %v228 = vmul.f32 1.0, %v227
    %v229 = vmul.f32 %v21, %v226
    %v230 = vmul.f32 %v22, %v228
    %231 = vst [vmem:[#allocation2] sm:$0xff] %v229
    %232 = vst [vmem:[#allocation2 + $0x8] sm:$0xff] %v230
    // Predicated region
    $region22: #{tpu_custom_call.1} parent=1 // pred_check
      _
    $region23: #{tpu_custom_call.1} parent=1 // pred_check_branch
      %234 = sbr.rel (0) target = $region25
    $region24: #{tpu_custom_call.1} parent=1 // pred_region
      %s236 = ssub.s32 256, 256
      %237 = vsyncadd [#allocation3], %s236
      %s238 = sshll.u32 [#allocation2], 4
      %s239 = int_to_ptr.vmem [resolvable:$true] %s238
      %244 = dma.vmem_to_hbm [thread:$0]  %s239, 256, %s5, [#allocation3], 128, 128, 8
    $region25: #{tpu_custom_call.1} parent=1 // pred_fallthru
      _
    // Predicated region
    $region26: #{tpu_custom_call.1} parent=1 // pred_check
      _
    $region27: #{tpu_custom_call.1} parent=1 // pred_check_branch
      %246 = sbr.rel (0) target = $region29
    $region28: #{tpu_custom_call.1} parent=1 // pred_region
      %247 = dma.done [#allocation3], 256
    $region29: #{tpu_custom_call.1} parent=1 // pred_fallthru
      _
    %248 = vsyncpa [#allocation3], 1

</llo_original>
